<compile_context>
chip_gen: v5e
topology: v5e:2x2
jax: 0.10.0
libtpu: 0.0.40
codegen_flags: <defaults>
</compile_context>

<pallas_src>
import functools

import jax
import jax.numpy as jnp
from jax import lax
from jax.experimental import pallas as pl
from jax.experimental.pallas import tpu as pltpu

IN_DIM = 100
HID_DIM = 64
HID_PAD = 128   # hidden dim zero-padded to one full lane width
OUT_DIM = 1


def _round_up(n: int, m: int) -> int:
    return ((n + m - 1) // m) * m


def prediction_kernel(x_ref, w1_ref, b1_ref, w2_ref, b2_ref, o_ref):
    # x_ref : (TB, IN_DIM)      f32   streamed batch tile (double-buffered)
    # w1_ref: (IN_DIM, HID_PAD) bf16  grid-invariant, VMEM-resident
    # b1_ref: (1, HID_PAD)      bf16  grid-invariant
    # b2_ref: (1, 1)            f32   scalar bias in SMEM
    # w2_ref: (1, HID_PAD)      bf16  layer-2 weight, transposed + zero-padded
    # o_ref : (1, TB)           f32   lane-dense output tile

    # Layer 1: Linear(100, 64) on the single-pass bf16 MXU path, f32 accumulate.
    x16 = x_ref[...].astype(jnp.bfloat16)
    acc = jnp.dot(x16, w1_ref[...], preferred_element_type=jnp.float32)

    # Bias + LeakyReLU(0.02) in bf16; maximum() form avoids the extra
    # compare+select of jnp.where.
    h = acc.astype(jnp.bfloat16) + b1_ref[...]
    h = jnp.maximum(h, h * 0.02)

    # Layer 2: Linear(64, 1), computed lane-dense: contract w2 (1, HID_PAD)
    # with h (TB, HID_PAD) over the feature axis -> (1, TB), so the store is
    # unmasked and full lane width.  (Same transposed-RHS contraction shape as
    # the flash-attention q.k^T einsum -- native bf16 MXU pattern.)
    y = lax.dot_general(
        w2_ref[...], h,
        dimension_numbers=(((1,), (1,)), ((), ())),
        preferred_element_type=jnp.float32,
    ) + b2_ref[0, 0]

    # Sigmoid (exp goes to the EUP; (1, TB) is tiny).
    o_ref[...] = 1.0 / (1.0 + jnp.exp(-y))


@functools.partial(jax.jit, static_argnames=("tb",))
def prediction_forward(x, w1, b1, w2, b2, *, tb=16384):
    """Forward pass.  x:(B,100), w1:(100,64), b1:(1,64), w2:(64,1), b2:(1,1)."""
    B = x.shape[0]

    # Batch tile:
    #  * multiple of 128 so the (1, TB) output block is lane-dense/unmasked,
    #  * capped at round_up(ceil(B/2), 128) so the grid has >= 2 steps whenever
    #    possible (both v7x TensorCores engage via the "parallel" axis),
    #  * default 16384 (~6.5 MiB f32 x tile; double-buffered x + bf16
    #    intermediates ~25 MiB, inside the raised VMEM limit on all of
    #    v5e / v6e / v7x).
    cap = _round_up(max((B + 1) // 2, 1), 128)
    TB = _round_up(max(min(tb, cap), 1), 128)

    num_blocks = (B + TB - 1) // TB          # ragged last block: NO x padding
    B_out = num_blocks * TB                  # only the tiny output is padded

    # Weights are tiny: cast/pad once per call (one-time cost, VMEM-resident
    # across all grid steps).  Hidden dim is zero-padded 64 -> 128 so the
    # intermediate tile is a full lane width; padding contributes exactly 0.
    w1_p = jnp.zeros((IN_DIM, HID_PAD), jnp.bfloat16).at[:, :HID_DIM].set(
        w1.astype(jnp.bfloat16))
    b1_p = jnp.zeros((1, HID_PAD), jnp.bfloat16).at[:, :HID_DIM].set(
        b1.astype(jnp.bfloat16).reshape(1, HID_DIM))
    w2_p = jnp.zeros((1, HID_PAD), jnp.bfloat16).at[:, :HID_DIM].set(
        w2.astype(jnp.bfloat16).reshape(HID_DIM, OUT_DIM).T)
    b2_p = jnp.asarray(b2, jnp.float32).reshape(1, 1)

    out = pl.pallas_call(
        prediction_kernel,
        out_shape=jax.ShapeDtypeStruct((1, B_out), jnp.float32),
        grid=(num_blocks,),
        in_specs=[
            pl.BlockSpec((TB, IN_DIM), lambda i: (i, 0)),       # x   (streamed)
            pl.BlockSpec((IN_DIM, HID_PAD), lambda i: (0, 0)),  # w1  (resident)
            pl.BlockSpec((1, HID_PAD), lambda i: (0, 0)),       # b1  (resident)
            pl.BlockSpec((1, HID_PAD), lambda i: (0, 0)),       # w2T (resident)
            pl.BlockSpec(memory_space=pltpu.MemorySpace.SMEM),  # b2  (scalar)
        ],
        out_specs=pl.BlockSpec((1, TB), lambda i: (0, i)),      # lane-dense out
        compiler_params=pltpu.CompilerParams(
            dimension_semantics=("parallel",),      # megacore sharding on v7x
            vmem_limit_bytes=48 * 1024 * 1024,      # room for TB=16384 tiles
        ),
    )(x, w1_p, b1_p, w2_p, b2_p)

    # (1, B_out) lane-dense result -> (B, 1) to match the PyTorch module;
    # junk columns from the ragged last block are sliced off here.
    return out.reshape(B_out, OUT_DIM)[:B]


def init_params(key):
    """Init mimicking PyTorch nn.Linear default U[-1/sqrt(fan_in), 1/sqrt(fan_in)]."""
    k1, k2, k3, k4 = jax.random.split(key, 4)
    bound1 = 1.0 / jnp.sqrt(IN_DIM)
    bound2 = 1.0 / jnp.sqrt(HID_DIM)
    w1 = jax.random.uniform(k1, (IN_DIM, HID_DIM), jnp.float32, -bound1, bound1)
    b1 = jax.random.uniform(k2, (1, HID_DIM), jnp.float32, -bound1, bound1)
    w2 = jax.random.uniform(k3, (HID_DIM, OUT_DIM), jnp.float32, -bound2, bound2)
    b2 = jax.random.uniform(k4, (1, OUT_DIM), jnp.float32, -bound2, bound2)
    return w1, b1, w2, b2


def reference_forward(x, w1, b1, w2, b2):
    h = x @ w1 + b1
    h = jnp.where(h > 0, h, 0.02 * h)
    return jax.nn.sigmoid(h @ w2 + b2)


if __name__ == "__main__":
    key = jax.random.PRNGKey(0)
    k_x, k_p = jax.random.split(key)
    w1, b1, w2, b2 = init_params(k_p)

    # Cases:
    #   B=8    : tiny batch, single (padded) block
    #   B=300  : tb=256 -> TB=256, grid=2, ragged last x block (no wrapper pad)
    #   B=2048 : default tb -> TB=1024, grid=2 (both v7x cores engaged)
    for B, tb in ((8, 16384), (300, 256), (2048, 16384)):
        x = jax.random.normal(jax.random.fold_in(k_x, B), (B, IN_DIM),
                              jnp.float32)
        out = jax.block_until_ready(
            prediction_forward(x, w1, b1, w2, b2, tb=tb))
        ref = reference_forward(x, w1, b1, w2, b2)
        assert out.shape == (B, OUT_DIM), out.shape
        # bf16-operand tolerances (f32 accumulate, sigmoid output in [0, 1]).
        assert jnp.allclose(out, ref, atol=2e-2, rtol=2e-2), (
            f"mismatch vs reference at B={B}: "
            f"max abs err {float(jnp.max(jnp.abs(out - ref)))}")

    print("KERNEL_OK")
</pallas_src>

<mosaic_0001>
module attributes {stable_mosaic.version = 11 : i64} {
  func.func @prediction_kernel(%arg0: i32, %arg1: memref<128x100xf32, #tpu.memory_space<vmem>>, %arg2: memref<100x128xbf16, #tpu.memory_space<vmem>>, %arg3: memref<1x128xbf16, #tpu.memory_space<vmem>>, %arg4: memref<1x128xbf16, #tpu.memory_space<vmem>>, %arg5: memref<1x1xf32, #tpu.memory_space<smem>>, %arg6: memref<1x128xf32, #tpu.memory_space<vmem>>) attributes {dimension_semantics = [#tpu.dimension_semantics<parallel>], iteration_bounds = array<i64: 1>, scalar_prefetch = 0 : i64, scratch_operands = 0 : i64, tpu.core_type = #tpu.core_type<tc>, window_params = [{transform_indices = @transform_0, window_bounds = array<i64: 128, 100>}, {pipeline_mode = #tpu.pipeline_mode<synchronous>, transform_indices = @transform_1, window_bounds = array<i64: 100, 128>}, {pipeline_mode = #tpu.pipeline_mode<synchronous>, transform_indices = @transform_2, window_bounds = array<i64: 1, 128>}, {pipeline_mode = #tpu.pipeline_mode<synchronous>, transform_indices = @transform_3, window_bounds = array<i64: 1, 128>}, {transform_indices = @transform_4, window_bounds = array<i64: 1, 1>}, {transform_indices = @transform_5, window_bounds = array<i64: 1, 128>}]} {
    %c0 = arith.constant 0 : index
    %c0_0 = arith.constant 0 : index
    %0 = vector.load %arg1[%c0, %c0_0] : memref<128x100xf32, #tpu.memory_space<vmem>>, vector<128x100xf32>
    %1 = arith.truncf %0 : vector<128x100xf32> to vector<128x100xbf16>
    %c0_1 = arith.constant 0 : index
    %c0_2 = arith.constant 0 : index
    %2 = vector.load %arg2[%c0_1, %c0_2] : memref<100x128xbf16, #tpu.memory_space<vmem>>, vector<100x128xbf16>
    %cst = arith.constant dense<0.000000e+00> : vector<128x128xf32>
    %3 = tpu.matmul %1, %2, %cst {dimension_numbers = #tpu.dot_dimension_numbers<[1], [0], [0], [1], [0, 0, 1, 1], [], []>} : vector<128x100xbf16>, vector<100x128xbf16>, vector<128x128xf32> -> vector<128x128xf32>
    %4 = arith.truncf %3 : vector<128x128xf32> to vector<128x128xbf16>
    %c0_3 = arith.constant 0 : index
    %c0_4 = arith.constant 0 : index
    %5 = vector.load %arg3[%c0_3, %c0_4] : memref<1x128xbf16, #tpu.memory_space<vmem>>, vector<1x128xbf16>
    %6 = vector.broadcast %5 : vector<1x128xbf16> to vector<128x128xbf16>
    %7 = arith.addf %4, %6 : vector<128x128xbf16>
    %cst_5 = arith.constant 2.001950e-02 : bf16
    %8 = vector.broadcast %cst_5 : bf16 to vector<128x128xbf16>
    %9 = arith.mulf %7, %8 : vector<128x128xbf16>
    %10 = arith.maximumf %7, %9 : vector<128x128xbf16>
    %c0_6 = arith.constant 0 : index
    %c0_7 = arith.constant 0 : index
    %11 = vector.load %arg4[%c0_6, %c0_7] : memref<1x128xbf16, #tpu.memory_space<vmem>>, vector<1x128xbf16>
    %cst_8 = arith.constant dense<0.000000e+00> : vector<1x128xf32>
    %12 = tpu.matmul %11, %10, %cst_8 {dimension_numbers = #tpu.dot_dimension_numbers<[1], [1], [0], [0], [0, 0, 1, 0], [], []>} : vector<1x128xbf16>, vector<128x128xbf16>, vector<1x128xf32> -> vector<1x128xf32>
    %c0_9 = arith.constant 0 : index
    %c0_10 = arith.constant 0 : index
    %13 = memref.load %arg5[%c0_9, %c0_10] : memref<1x1xf32, #tpu.memory_space<smem>>
    %14 = vector.broadcast %13 : f32 to vector<1x128xf32>
    %15 = arith.addf %12, %14 : vector<1x128xf32>
    %cst_11 = arith.constant 0.000000e+00 : f32
    %16 = vector.broadcast %cst_11 : f32 to vector<1x128xf32>
    %17 = arith.subf %16, %15 : vector<1x128xf32>
    %18 = math.exp %17 : vector<1x128xf32>
    %cst_12 = arith.constant 1.000000e+00 : f32
    %19 = vector.broadcast %cst_12 : f32 to vector<1x128xf32>
    %20 = arith.addf %19, %18 : vector<1x128xf32>
    %cst_13 = arith.constant 1.000000e+00 : f32
    %21 = vector.broadcast %cst_13 : f32 to vector<1x128xf32>
    %22 = arith.divf %21, %20 : vector<1x128xf32>
    %c0_14 = arith.constant 0 : index
    %c0_15 = arith.constant 0 : index
    %23 = vector.load %arg6[%c0_14, %c0_15] : memref<1x128xf32, #tpu.memory_space<vmem>>, vector<1x128xf32>
    tpu.vector_store %arg6[%c0_14, %c0_15], %22 {strides = array<i32>} : memref<1x128xf32, #tpu.memory_space<vmem>>, vector<1x128xf32>,
    return
  }
  func.func @transform_0(%arg0: i32) -> (i32, i32) {
    %c0_i32 = arith.constant 0 : i32
    %c0_i32_0 = arith.constant 0 : i32
    return %arg0, %c0_i32 : i32, i32
  }
  func.func @transform_1(%arg0: i32) -> (i32, i32) {
    %c0_i32 = arith.constant 0 : i32
    %c0_i32_0 = arith.constant 0 : i32
    %c0_i32_1 = arith.constant 0 : i32
    return %c0_i32, %c0_i32_0 : i32, i32
  }
  func.func @transform_2(%arg0: i32) -> (i32, i32) {
    %c0_i32 = arith.constant 0 : i32
    %c0_i32_0 = arith.constant 0 : i32
    %c0_i32_1 = arith.constant 0 : i32
    return %c0_i32, %c0_i32_0 : i32, i32
  }
  func.func @transform_3(%arg0: i32) -> (i32, i32) {
    %c0_i32 = arith.constant 0 : i32
    %c0_i32_0 = arith.constant 0 : i32
    %c0_i32_1 = arith.constant 0 : i32
    return %c0_i32, %c0_i32_0 : i32, i32
  }
  func.func @transform_4(%arg0: i32) -> (i32, i32) {
    %c0_i32 = arith.constant 0 : i32
    %c0_i32_0 = arith.constant 0 : i32
    %c0_i32_1 = arith.constant 0 : i32
    return %c0_i32, %c0_i32_0 : i32, i32
  }
  func.func @transform_5(%arg0: i32) -> (i32, i32) {
    %c0_i32 = arith.constant 0 : i32
    %c0_i32_0 = arith.constant 0 : i32
    return %c0_i32, %arg0 : i32, i32
  }
}

</mosaic_0001>

<llo_original>
// kernel: prediction_forward.1
$region0: #{prediction_forward.1}
  #allocation0 [shape = 'u32[]', space=smem, size = 0x4, offset = 0x4, fixed_abs, tag = 'smem constant byte address 0x4 - core index']
  #allocation1 [shape = 'u32[72,128]{1,0:T(1,128)}', space=vmem, size = 0x9000, scoped, tag = 'internal scratch']
  #allocation2 [shape = 'f32[1,1]{1,0:T(1,128)S(6)}', space=smem, size = 0x200, scoped, tag = 'scoped memory for prediction_forward.1']
  %s0 = inlined_call_operand.vmem [shape: f32[8,100], index: 0, kind: input, shape index: {}]
  %s1 = inlined_call_operand.vmem [shape: bf16[100,128], index: 1, kind: input, shape index: {}]
  %s2 = inlined_call_operand.vmem [shape: bf16[1,128], index: 2, kind: input, shape index: {}]
  %s3 = inlined_call_operand.vmem [shape: bf16[1,128], index: 3, kind: input, shape index: {}]
  %s4 = inlined_call_operand.<no memory space> [shape: f32[1,1], index: 4, kind: input, shape index: {}]
  %s5 = inlined_call_operand.vmem [shape: f32[1,128], index: 5, kind: output, shape index: {}]
  %s6 = sld [smem:[#allocation0]]
  $region30: #{prediction_forward.1} parent=0
    _
  %s8 = ssub.s32 1, %s6
  %s9 = scalar_select 0, %s8, %s6
  %10 = sst [smem:[#allocation2]] %s4
  // Predicated region
  $region2: #{prediction_forward.1} parent=0 // pred_check
    _
  $region3: #{prediction_forward.1} parent=0 // pred_check_branch
    %12 = sbr.rel (0) target = $region5
  $region4: #{prediction_forward.1} parent=0 // pred_region
    _
  $region5: #{prediction_forward.1} parent=0 // pred_fallthru
    _
  // Predicated region
  $region6: #{prediction_forward.1} parent=0 // pred_check
    _
  $region7: #{prediction_forward.1} parent=0 // pred_check_branch
    %14 = sbr.rel (0) target = $region9
  $region8: #{prediction_forward.1} parent=0 // pred_region
    _
  $region9: #{prediction_forward.1} parent=0 // pred_fallthru
    _
  // Predicated region
  $region10: #{prediction_forward.1} parent=0 // pred_check
    _
  $region11: #{prediction_forward.1} parent=0 // pred_check_branch
    %16 = sbr.rel (0) target = $region13
  $region12: #{prediction_forward.1} parent=0 // pred_region
    _
  $region13: #{prediction_forward.1} parent=0 // pred_fallthru
    _
  // Predicated region
  $region14: #{prediction_forward.1} parent=0 // pred_check
    _
  $region15: #{prediction_forward.1} parent=0 // pred_check_branch
    %18 = sbr.rel (0) target = $region17
  $region16: #{prediction_forward.1} parent=0 // pred_region
    _
  $region17: #{prediction_forward.1} parent=0 // pred_fallthru
    _
  // Predicated region
  $region18: #{prediction_forward.1} parent=0 // pred_check
    _
  $region19: #{prediction_forward.1} parent=0 // pred_check_branch
    %20 = sbr.rel (0) target = $region21
  $region20: #{prediction_forward.1} parent=0 // pred_region
    _
  $region21: #{prediction_forward.1} parent=0 // pred_fallthru
    _
  %v22 = vld [vmem:[%s0] sm:$0xff]
  %v23 = vld [vmem:[%s0 + $0x8] sm:$0xff]
  %v24 = vld [vmem:[%s0 + $0x10] sm:$0xff]
  %v25 = vld [vmem:[%s0 + $0x18] sm:$0xff]
  %v26 = vld [vmem:[%s0 + $0x20] sm:$0xff]
  %v27 = vld [vmem:[%s0 + $0x28] sm:$0xff]
  %v28 = vld [vmem:[%s0 + $0x30] sm:$0xff]
  %v29 = vld [vmem:[%s0 + $0x38] sm:$0xff]
  %v30 = vld [vmem:[%s0 + $0x40] sm:$0xff]
  %v31 = vld [vmem:[%s0 + $0x48] sm:$0xff]
  %v32 = vld [vmem:[%s0 + $0x50] sm:$0xff]
  %v33 = vld [vmem:[%s0 + $0x58] sm:$0xff]
  %v34 = vld [vmem:[%s0 + $0x60] sm:$0xff]
  %v35 = vld [vmem:[%s0 + $0x68] sm:$0xff]
  %v36 = vld [vmem:[%s0 + $0x70] sm:$0xff]
  %v37 = vld [vmem:[%s0 + $0x78] sm:$0xff]
  %v38 = vpack.c.bf16 %v23, %v22
  %v39 = vpack.c.bf16 %v25, %v24
  %v40 = vpack.c.bf16 %v27, %v26
  %v41 = vpack.c.bf16 %v29, %v28
  %v42 = vpack.c.bf16 %v31, %v30
  %v43 = vpack.c.bf16 %v33, %v32
  %v44 = vpack.c.bf16 %v35, %v34
  %v45 = vpack.c.bf16 %v37, %v36
  %v46 = vld [vmem:[%s1] sm:$0xf]
  %v47 = vld [vmem:[%s1 + $0x4] sm:$0xf]
  %v48 = vld [vmem:[%s1 + $0x8] sm:$0xf]
  %v49 = vld [vmem:[%s1 + $0xc] sm:$0xf]
  %v50 = vld [vmem:[%s1 + $0x10] sm:$0xf]
  %v51 = vld [vmem:[%s1 + $0x14] sm:$0xf]
  %v52 = vld [vmem:[%s1 + $0x18] sm:$0xf]
  %v53 = vld [vmem:[%s1 + $0x1c] sm:$0xf]
  %v54 = vld [vmem:[%s1 + $0x20] sm:$0xf]
  %v55 = vld [vmem:[%s1 + $0x24] sm:$0xf]
  %v56 = vld [vmem:[%s1 + $0x28] sm:$0xf]
  %v57 = vld [vmem:[%s1 + $0x2c] sm:$0xf]
  %v58 = vld [vmem:[%s1 + $0x30] sm:$0x3]
  %v72 = vunpack.c.l.b16 %v46
  %v73 = vunpack.c.l.b16 %v47
  %v74 = vunpack.c.l.b16 %v48
  %v75 = vunpack.c.l.b16 %v49
  %v76 = vunpack.c.l.b16 %v50
  %v77 = vunpack.c.l.b16 %v51
  %v78 = vunpack.c.l.b16 %v52
  %v79 = vunpack.c.l.b16 %v53
  %v80 = vunpack.c.l.b16 %v54
  %v81 = vunpack.c.l.b16 %v55
  %v82 = vunpack.c.l.b16 %v56
  %v83 = vunpack.c.l.b16 %v57
  %v84 = vunpack.c.l.b16 %v58
  %v85 = vpack.c.b16 %v73, %v72
  %v86 = vpack.c.b16 %v75, %v74
  %v87 = vpack.c.b16 %v77, %v76
  %v88 = vpack.c.b16 %v79, %v78
  %v89 = vpack.c.b16 %v81, %v80
  %v90 = vpack.c.b16 %v83, %v82
  %v91 = vpack.c.b16 %v84, %v84
  %vm98 = vcmask 818176
  %v100 = vsel %vm98, %v38, 0
  %v103 = vsel %vm98, %v39, 0
  %v106 = vsel %vm98, %v40, 0
  %v109 = vsel %vm98, %v41, 0
  %v112 = vsel %vm98, %v42, 0
  %v115 = vsel %vm98, %v43, 0
  %v118 = vsel %vm98, %v44, 0
  %v121 = vsel %vm98, %v45, 0
  %vm123 = vcmask 1041408
  %v125 = vsel %vm123, %v91, 0
  %127 = vmatpush.bf16.msra.mxu0 0
  %128 = vmatpush.bf16.msra.mxu0 %v125
  %129 = vmatpush.bf16.msra.mxu0 %v90
  %130 = vmatpush.bf16.msra.mxu0 %v89
  %131 = vmatpush.bf16.msra.mxu0 %v88
  %132 = vmatpush.bf16.msra.mxu0 %v87
  %133 = vmatpush.bf16.msra.mxu0 %v86
  %134 = vmatpush.bf16.msra.mxu0 %v85
  %135 = vmatmul.bf16.gmra.mxu0 %v100
  %v136 = vpop.f32.mrf.mxu0
  %v137 = vadd.f32 0.0, %v136
  %v138 = vpop.f32.mrf.mxu0
  %v139 = vadd.f32 0.0, %v138
  %140 = vmatmul.bf16.gmra.mxu0 %v103
  %v141 = vpop.f32.mrf.mxu0
  %v142 = vadd.f32 0.0, %v141
  %v143 = vpop.f32.mrf.mxu0
  %v144 = vadd.f32 0.0, %v143
  %145 = vmatmul.bf16.gmra.mxu0 %v106
  %v146 = vpop.f32.mrf.mxu0
  %v147 = vadd.f32 0.0, %v146
  %v148 = vpop.f32.mrf.mxu0
  %v149 = vadd.f32 0.0, %v148
  %150 = vmatmul.bf16.gmra.mxu0 %v109
  %v151 = vpop.f32.mrf.mxu0
  %v152 = vadd.f32 0.0, %v151
  %v153 = vpop.f32.mrf.mxu0
  %v154 = vadd.f32 0.0, %v153
  %155 = vmatmul.bf16.gmra.mxu0 %v112
  %v156 = vpop.f32.mrf.mxu0
  %v157 = vadd.f32 0.0, %v156
  %v158 = vpop.f32.mrf.mxu0
  %v159 = vadd.f32 0.0, %v158
  %160 = vmatmul.bf16.gmra.mxu0 %v115
  %v161 = vpop.f32.mrf.mxu0
  %v162 = vadd.f32 0.0, %v161
  %v163 = vpop.f32.mrf.mxu0
  %v164 = vadd.f32 0.0, %v163
  %165 = vmatmul.bf16.gmra.mxu0 %v118
  %v166 = vpop.f32.mrf.mxu0
  %v167 = vadd.f32 0.0, %v166
  %v168 = vpop.f32.mrf.mxu0
  %v169 = vadd.f32 0.0, %v168
  %170 = vmatmul.bf16.gmra.mxu0 %v121
  %v171 = vpop.f32.mrf.mxu0
  %v172 = vadd.f32 0.0, %v171
  %v173 = vpop.f32.mrf.mxu0
  %v174 = vadd.f32 0.0, %v173
  %175 = vdwg.mxu0
  %v176 = vpack.c.bf16 %v137, %v137
  %v177 = vpack.c.bf16 %v139, %v139
  %v178 = vpack.c.bf16 %v142, %v142
  %v179 = vpack.c.bf16 %v144, %v144
  %v180 = vpack.c.bf16 %v147, %v147
  %v181 = vpack.c.bf16 %v149, %v149
  %v182 = vpack.c.bf16 %v152, %v152
  %v183 = vpack.c.bf16 %v154, %v154
  %v184 = vpack.c.bf16 %v157, %v157
  %v185 = vpack.c.bf16 %v159, %v159
  %v186 = vpack.c.bf16 %v162, %v162
  %v187 = vpack.c.bf16 %v164, %v164
  %v188 = vpack.c.bf16 %v167, %v167
  %v189 = vpack.c.bf16 %v169, %v169
  %v190 = vpack.c.bf16 %v172, %v172
  %v191 = vpack.c.bf16 %v174, %v174
  %v192 = vld [vmem:[%s2] sm:$0x1]
  %v194 = vpack.i.b16 %v192, %v192
  %v196 = vperm.slane %v194, 0
  %v197 = vunpack.c.l.bf16 %v176
  %v198 = vunpack.c.l.bf16 %v177
  %v199 = vunpack.c.l.bf16 %v178
  %v200 = vunpack.c.l.bf16 %v179
  %v201 = vunpack.c.l.bf16 %v180
  %v202 = vunpack.c.l.bf16 %v181
  %v203 = vunpack.c.l.bf16 %v182
  %v204 = vunpack.c.l.bf16 %v183
  %v205 = vunpack.c.l.bf16 %v184
  %v206 = vunpack.c.l.bf16 %v185
  %v207 = vunpack.c.l.bf16 %v186
  %v208 = vunpack.c.l.bf16 %v187
  %v209 = vunpack.c.l.bf16 %v188
  %v210 = vunpack.c.l.bf16 %v189
  %v211 = vunpack.c.l.bf16 %v190
  %v212 = vunpack.c.l.bf16 %v191
  %v213 = vunpack.c.l.bf16 %v196
  %v214 = vadd.f32 %v197, %v213
  %v215 = vadd.f32 %v198, %v213
  %v216 = vadd.f32 %v199, %v213
  %v217 = vadd.f32 %v200, %v213
  %v218 = vadd.f32 %v201, %v213
  %v219 = vadd.f32 %v202, %v213
  %v220 = vadd.f32 %v203, %v213
  %v221 = vadd.f32 %v204, %v213
  %v222 = vadd.f32 %v205, %v213
  %v223 = vadd.f32 %v206, %v213
  %v224 = vadd.f32 %v207, %v213
  %v225 = vadd.f32 %v208, %v213
  %v226 = vadd.f32 %v209, %v213
  %v227 = vadd.f32 %v210, %v213
  %v228 = vadd.f32 %v211, %v213
  %v229 = vadd.f32 %v212, %v213
  %v230 = vpack.c.bf16 %v214, %v214
  %v231 = vpack.c.bf16 %v215, %v215
  %v232 = vpack.c.bf16 %v216, %v216
  %v233 = vpack.c.bf16 %v217, %v217
  %v234 = vpack.c.bf16 %v218, %v218
  %v235 = vpack.c.bf16 %v219, %v219
  %v236 = vpack.c.bf16 %v220, %v220
  %v237 = vpack.c.bf16 %v221, %v221
  %v238 = vpack.c.bf16 %v222, %v222
  %v239 = vpack.c.bf16 %v223, %v223
  %v240 = vpack.c.bf16 %v224, %v224
  %v241 = vpack.c.bf16 %v225, %v225
  %v242 = vpack.c.bf16 %v226, %v226
  %v243 = vpack.c.bf16 %v227, %v227
  %v244 = vpack.c.bf16 %v228, %v228
  %v245 = vpack.c.bf16 %v229, %v229
  %v246 = vunpack.c.l.bf16 %v230
  %v247 = vunpack.c.l.bf16 %v231
  %v248 = vunpack.c.l.bf16 %v232
  %v249 = vunpack.c.l.bf16 %v233
  %v250 = vunpack.c.l.bf16 %v234
  %v251 = vunpack.c.l.bf16 %v235
  %v252 = vunpack.c.l.bf16 %v236
  %v253 = vunpack.c.l.bf16 %v237
  %v254 = vunpack.c.l.bf16 %v238
  %v255 = vunpack.c.l.bf16 %v239
  %v256 = vunpack.c.l.bf16 %v240
  %v257 = vunpack.c.l.bf16 %v241
  %v258 = vunpack.c.l.bf16 %v242
  %v259 = vunpack.c.l.bf16 %v243
  %v260 = vunpack.c.l.bf16 %v244
  %v261 = vunpack.c.l.bf16 %v245
  %v262 = vmul.f32 %v246, 0.020019531
  %v263 = vmul.f32 %v247, 0.020019531
  %v264 = vmul.f32 %v248, 0.020019531
  %v265 = vmul.f32 %v249, 0.020019531
  %v266 = vmul.f32 %v250, 0.020019531
  %v267 = vmul.f32 %v251, 0.020019531
  %v268 = vmul.f32 %v252, 0.020019531
  %v269 = vmul.f32 %v253, 0.020019531
  %v270 = vmul.f32 %v254, 0.020019531
  %v271 = vmul.f32 %v255, 0.020019531
  %v272 = vmul.f32 %v256, 0.020019531
  %v273 = vmul.f32 %v257, 0.020019531
  %v274 = vmul.f32 %v258, 0.020019531
  %v275 = vmul.f32 %v259, 0.020019531
  %v276 = vmul.f32 %v260, 0.020019531
  %v277 = vmul.f32 %v261, 0.020019531
  %v278 = vpack.c.bf16 %v262, %v262
  %v279 = vpack.c.bf16 %v263, %v263
  %v280 = vpack.c.bf16 %v264, %v264
  %v281 = vpack.c.bf16 %v265, %v265
  %v282 = vpack.c.bf16 %v266, %v266
  %v283 = vpack.c.bf16 %v267, %v267
  %v284 = vpack.c.bf16 %v268, %v268
  %v285 = vpack.c.bf16 %v269, %v269
  %v286 = vpack.c.bf16 %v270, %v270
  %v287 = vpack.c.bf16 %v271, %v271
  %v288 = vpack.c.bf16 %v272, %v272
  %v289 = vpack.c.bf16 %v273, %v273
  %v290 = vpack.c.bf16 %v274, %v274
  %v291 = vpack.c.bf16 %v275, %v275
  %v292 = vpack.c.bf16 %v276, %v276
  %v293 = vpack.c.bf16 %v277, %v277
  %v294 = vunpack.c.l.bf16 %v278
  %v295 = vunpack.c.l.bf16 %v279
  %v296 = vunpack.c.l.bf16 %v280
  %v297 = vunpack.c.l.bf16 %v281
  %v298 = vunpack.c.l.bf16 %v282
  %v299 = vunpack.c.l.bf16 %v283
  %v300 = vunpack.c.l.bf16 %v284
  %v301 = vunpack.c.l.bf16 %v285
  %v302 = vunpack.c.l.bf16 %v286
  %v303 = vunpack.c.l.bf16 %v287
  %v304 = vunpack.c.l.bf16 %v288
  %v305 = vunpack.c.l.bf16 %v289
  %v306 = vunpack.c.l.bf16 %v290
  %v307 = vunpack.c.l.bf16 %v291
  %v308 = vunpack.c.l.bf16 %v292
  %v309 = vunpack.c.l.bf16 %v293
  %v310 = vmax.f32 %v246, %v294
  %v311 = vmax.f32 %v247, %v295
  %v312 = vmax.f32 %v248, %v296
  %v313 = vmax.f32 %v249, %v297
  %v314 = vmax.f32 %v250, %v298
  %v315 = vmax.f32 %v251, %v299
  %v316 = vmax.f32 %v252, %v300
  %v317 = vmax.f32 %v253, %v301
  %v318 = vmax.f32 %v254, %v302
  %v319 = vmax.f32 %v255, %v303
  %v320 = vmax.f32 %v256, %v304
  %v321 = vmax.f32 %v257, %v305
  %v322 = vmax.f32 %v258, %v306
  %v323 = vmax.f32 %v259, %v307
  %v324 = vmax.f32 %v260, %v308
  %v325 = vmax.f32 %v261, %v309
  %v326 = vpack.c.bf16 %v311, %v310
  %v327 = vpack.c.bf16 %v313, %v312
  %v328 = vpack.c.bf16 %v315, %v314
  %v329 = vpack.c.bf16 %v317, %v316
  %v330 = vpack.c.bf16 %v319, %v318
  %v331 = vpack.c.bf16 %v321, %v320
  %v332 = vpack.c.bf16 %v323, %v322
  %v333 = vpack.c.bf16 %v325, %v324
  %v334 = vld [vmem:[%s3] sm:$0x1]
  %s335 = sld [smem:[#allocation2]]
  %v336 = vstv %s335
  %337 = vmatpush.bf16.xpose.msra.mxu0 %v333
  %338 = vmatpush.bf16.xpose.msra.mxu0 %v332
  %339 = vmatpush.bf16.xpose.msra.mxu0 %v331
  %340 = vmatpush.bf16.xpose.msra.mxu0 %v330
  %341 = vmatpush.bf16.xpose.msra.mxu0 %v329
  %342 = vmatpush.bf16.xpose.msra.mxu0 %v328
  %343 = vmatpush.bf16.xpose.msra.mxu0 %v327
  %344 = vmatpush.bf16.xpose.msra.mxu0 %v326
  %345 = vmatmul.bf16.gmra.mxu0 %v334
  %v346 = vpop.f32.mrf.mxu0
  %v347 = vadd.f32 %v336, %v346
  %v348 = vpop.f32.mrf.mxu0
  %349 = vdwg.mxu0
  %v350 = vsub.f32 0.0, %v347
  %v351 = vmul.f32 %v350, 1.442695
  %v352 = vpow.pop %v351
  %v353 = vadd.f32 %v352, 1.0
  %v354 = vrcp.pop %v353
  %v355 = vmul.f32 %v353, %v354
  %v356 = vsub.f32 1.0, %v355
  %v357 = vmul.f32 %v354, %v356
  %v358 = vadd.f32 %v354, %v357
  %vm359 = vweird.f32 %v353
  %vm360 = vweird.f32 %v354
  %vm361 = vmor %vm359, %vm360
  %v362 = vsel %vm361, %v354, %v358
  %v363 = vand.u32 2147483647, %v353
  %vm364 = vcmp.eq.f32.partialorder %v363, 8.507059e+37
  %v365 = vand.u32 %v353, 2147483648
  %v366 = vor.u32 1.1754944e-38, %v365
  %v367 = vsel %vm364, %v366, %v362
  %v368 = vmul.f32 1.0, %v367
  %369 = vst [vmem:[%s5] sm:$0x1] %v368
  // Predicated region
  $region22: #{prediction_forward.1} parent=0 // pred_check
    _
  $region23: #{prediction_forward.1} parent=0 // pred_check_branch
    %371 = sbr.rel (0) target = $region25
  $region24: #{prediction_forward.1} parent=0 // pred_region
    _
  $region25: #{prediction_forward.1} parent=0 // pred_fallthru
    _
  // Predicated region
  $region26: #{prediction_forward.1} parent=0 // pred_check
    _
  $region27: #{prediction_forward.1} parent=0 // pred_check_branch
    %373 = sbr.rel (0) target = $region29
  $region28: #{prediction_forward.1} parent=0 // pred_region
    _
  $region29: #{prediction_forward.1} parent=0 // pred_fallthru
    _

</llo_original>
